<compile_context>
chip_gen: v7x
topology: tpu7x:2x2x1
jax: 0.10.0
libtpu: 0.0.40
codegen_flags: <defaults>
</compile_context>

<pallas_src>
import functools

import jax
import jax.numpy as jnp
from jax.experimental import pallas as pl
from jax.experimental.pallas import tpu as pltpu

KERNEL_SIZE = 3
PAD = (KERNEL_SIZE - 1) // 2


def _spatial_attention_kernel(w_ref, bias_ref, x_ref, o_ref, max_ref, sum_ref,
                              *, C, H, W):
    # w_ref:    SMEM (2*k*k,)          flattened conv weight, layout [ic, kh, kw]
    # bias_ref: SMEM (1,)              conv bias
    # x_ref:    VMEM (1, c_chunk, H*W) lane-dense input block
    # o_ref:    VMEM (1, 1, H*W)       lane-dense attention map (one per batch elem)
    # max_ref / sum_ref: VMEM (1, H*W) f32 running channel max / sum
    HW = H * W
    c_idx = pl.program_id(1)
    n_c = pl.num_programs(1)

    chunk = x_ref[0].astype(jnp.float32)                    # (c_chunk, HW) in f32
    chunk_max = jnp.max(chunk, axis=0, keepdims=True)       # (1, HW)
    chunk_sum = jnp.sum(chunk, axis=0, keepdims=True)       # (1, HW)

    @pl.when(c_idx == 0)
    def _():
        max_ref[...] = jnp.full_like(max_ref, -jnp.inf)
        sum_ref[...] = jnp.zeros_like(sum_ref)

    max_ref[...] = jnp.maximum(max_ref[...], chunk_max)
    sum_ref[...] = sum_ref[...] + chunk_sum

    @pl.when(c_idx == n_c - 1)
    def _():
        # Stack max/avg pooled maps on the sublane axis so one roll serves both taps.
        pool = jnp.concatenate(
            [max_ref[...], sum_ref[...] * (1.0 / C)], axis=0)  # (2, HW) f32

        # Flat-space row/col indices for the conv boundary masks (exact for HW < 2^24).
        pos = jax.lax.broadcasted_iota(jnp.int32, (1, HW), 1).astype(jnp.float32)
        row = jnp.floor(pos / W)
        col = pos - row * W

        acc = jnp.zeros((1, HW), jnp.float32)
        for kh in range(KERNEL_SIZE):
            dy = kh - PAD
            if dy < 0:
                row_ok = row >= (-dy) - 0.5          # row + dy >= 0
            elif dy > 0:
                row_ok = row <= (H - 1 - dy) + 0.5   # row + dy <= H-1
            else:
                row_ok = None
            for kw in range(KERNEL_SIZE):
                dx = kw - PAD
                if dx < 0:
                    col_ok = col >= (-dx) - 0.5
                elif dx > 0:
                    col_ok = col <= (W - 1 - dx) + 0.5
                else:
                    col_ok = None

                if row_ok is None:
                    mask = col_ok
                elif col_ok is None:
                    mask = row_ok
                else:
                    mask = jnp.logical_and(row_ok, col_ok)

                # tap[p] = pooled[p + dy*W + dx] where in-bounds: cyclic lane roll
                # (XLU, positive axis required) + boundary mask instead of
                # padding/slice copies.
                shift = (-(dy * W + dx)) % HW
                if shift == 0:
                    shifted = pool
                else:
                    shifted = pltpu.roll(pool, shift=shift, axis=1)

                w_max = w_ref[0 * KERNEL_SIZE * KERNEL_SIZE + kh * KERNEL_SIZE + kw]
                w_avg = w_ref[1 * KERNEL_SIZE * KERNEL_SIZE + kh * KERNEL_SIZE + kw]
                tap = w_max * shifted[0:1, :] + w_avg * shifted[1:2, :]   # (1, HW)
                if mask is not None:
                    tap = jnp.where(mask, tap, 0.0)
                acc = acc + tap

        att = jax.nn.sigmoid(acc + bias_ref[0])              # (1, HW) f32
        o_ref[0] = att.astype(o_ref.dtype)


def _largest_c_chunk(C, bytes_per_channel, budget_bytes):
    """Full C if it fits the budget, else the largest divisor of C that is a
    multiple of 8 and fits; falls back to full C."""
    max_ch = max(1, budget_bytes // max(1, bytes_per_channel))
    if C <= max_ch:
        return C
    best = None
    for d in range(8, int(max_ch) + 1, 8):
        if C % d == 0:
            best = d
    return best if best is not None else C


def spatial_attention(x, weight, bias, *, c_chunk_budget_bytes=2 << 20):
    """x: (B, C, H, W); weight: (1, 2, k, k) f32; bias: (1,) f32.

    Returns the (B, C, H, W) attention map (sigmoid(conv) repeated over C), matching
    the PyTorch module.  The Pallas kernel only computes and stores the non-redundant
    (B, 1, H*W) map; the repeat over C is a broadcast in XLA (fuse `x * att`
    downstream instead of materializing it when possible).
    """
    B, C, H, W = x.shape
    HW = H * W
    w_flat = weight.reshape(-1).astype(jnp.float32)          # (2*k*k,)
    bias = bias.reshape(-1).astype(jnp.float32)              # (1,)

    x_flat = x.reshape(B, C, HW)                             # lane-dense streaming layout

    itemsize = jnp.dtype(x.dtype).itemsize
    c_chunk = _largest_c_chunk(C, HW * itemsize, c_chunk_budget_bytes)
    n_c = C // c_chunk

    in_block_bytes = c_chunk * HW * itemsize
    out_block_bytes = HW * itemsize
    scratch_bytes = 2 * HW * 4
    vmem_limit = int(2 * (in_block_bytes + out_block_bytes) + scratch_bytes + (8 << 20))

    kernel = functools.partial(_spatial_attention_kernel, C=C, H=H, W=W)

    att = pl.pallas_call(
        kernel,
        out_shape=jax.ShapeDtypeStruct((B, 1, HW), x.dtype),
        grid=(B, n_c),
        in_specs=[
            pl.BlockSpec(memory_space=pltpu.MemorySpace.SMEM),        # conv weight
            pl.BlockSpec(memory_space=pltpu.MemorySpace.SMEM),        # conv bias
            pl.BlockSpec((1, c_chunk, HW), lambda b, c: (b, c, 0)),   # x, one chunk/step
        ],
        out_specs=pl.BlockSpec((1, 1, HW), lambda b, c: (b, 0, 0)),
        scratch_shapes=[
            pltpu.VMEM((1, HW), jnp.float32),   # running channel max
            pltpu.VMEM((1, HW), jnp.float32),   # running channel sum
        ],
        compiler_params=pltpu.CompilerParams(
            dimension_semantics=("parallel", "arbitrary"),
            vmem_limit_bytes=vmem_limit,
        ),
    )(w_flat, bias, x_flat)

    att = att.reshape(B, 1, H, W)
    return jnp.broadcast_to(att, (B, C, H, W))


def spatial_attention_reference(x, weight, bias):
    """Pure-JAX reference mirroring the PyTorch forward."""
    max_pool = jnp.max(x, axis=1, keepdims=True)
    avg_pool = jnp.mean(x, axis=1, keepdims=True)
    pool = jnp.concatenate([max_pool, avg_pool], axis=1)     # (B, 2, H, W)
    conv = jax.lax.conv_general_dilated(
        pool, weight, window_strides=(1, 1), padding="SAME",
        dimension_numbers=("NCHW", "OIHW", "NCHW"))
    conv = conv + bias.reshape(1, -1, 1, 1)
    conv = jnp.repeat(conv, x.shape[1], axis=1)
    return jax.nn.sigmoid(conv)


if __name__ == "__main__":
    key = jax.random.PRNGKey(0)
    kx, kw, kb = jax.random.split(key, 3)

    B, C, H, W = 2, 4, 16, 16
    x = jax.random.normal(kx, (B, C, H, W), dtype=jnp.float32)

    # Deterministic Conv2d(2 -> 1, k=3) parameter init (uniform, PyTorch-like bound).
    fan_in = 2 * KERNEL_SIZE * KERNEL_SIZE
    bound = 1.0 / (fan_in ** 0.5)
    weight = jax.random.uniform(kw, (1, 2, KERNEL_SIZE, KERNEL_SIZE),
                                dtype=jnp.float32, minval=-bound, maxval=bound)
    bias = jax.random.uniform(kb, (1,), dtype=jnp.float32,
                              minval=-bound, maxval=bound)

    out = spatial_attention(x, weight, bias)
    out = jax.block_until_ready(out)

    ref = spatial_attention_reference(x, weight, bias)
    assert out.shape == (B, C, H, W)
    assert jnp.allclose(out, ref, atol=1e-5, rtol=1e-5), \
        float(jnp.max(jnp.abs(out - ref)))

    print("KERNEL_OK")
</pallas_src>

<mosaic_0001>
module attributes {stable_mosaic.version = 11 : i64} {
  func.func @_spatial_attention_kernel(%arg0: i32, %arg1: i32, %arg2: memref<18xf32, #tpu.memory_space<smem>>, %arg3: memref<1xf32, #tpu.memory_space<smem>>, %arg4: memref<1x4x256xf32, #tpu.memory_space<vmem>>, %arg5: memref<1x1x256xf32, #tpu.memory_space<vmem>>, %arg6: memref<1x256xf32, #tpu.memory_space<vmem>>, %arg7: memref<1x256xf32, #tpu.memory_space<vmem>>) attributes {dimension_semantics = [#tpu.dimension_semantics<parallel>, #tpu.dimension_semantics<arbitrary>], iteration_bounds = array<i64: 2, 1>, scalar_prefetch = 0 : i64, scratch_operands = 2 : i64, tpu.core_type = #tpu.core_type<tc>, window_params = [{transform_indices = @transform_0, window_bounds = array<i64: 18>}, {transform_indices = @transform_1, window_bounds = array<i64: 1>}, {transform_indices = @transform_2, window_bounds = array<i64: 1, 4, 256>}, {transform_indices = @transform_3, window_bounds = array<i64: 1, 1, 256>}]} {
    %c0 = arith.constant 0 : index
    %c0_0 = arith.constant 0 : index
    %c0_1 = arith.constant 0 : index
    %0 = vector.load %arg4[%c0, %c0_0, %c0_1] : memref<1x4x256xf32, #tpu.memory_space<vmem>>, vector<1x4x256xf32>
    %1 = vector.shape_cast %0 : vector<1x4x256xf32> to vector<4x256xf32>
    %cst = arith.constant dense<0xFF800000> : vector<256xf32>
    %2 = vector.multi_reduction <maximumf>, %1, %cst [0] : vector<4x256xf32> to vector<256xf32>
    %3 = vector.shape_cast %2 : vector<256xf32> to vector<1x256xf32>
    %cst_2 = arith.constant dense<0.000000e+00> : vector<256xf32>
    %4 = vector.multi_reduction <add>, %1, %cst_2 [0] : vector<4x256xf32> to vector<256xf32>
    %5 = vector.shape_cast %4 : vector<256xf32> to vector<1x256xf32>
    %c0_i32 = arith.constant 0 : i32
    %6 = arith.cmpi eq, %arg1, %c0_i32 : i32
    %7 = arith.extui %6 : i1 to i32
    %c0_i32_3 = arith.constant 0 : i32
    %8 = arith.cmpi ne, %7, %c0_i32_3 : i32
    scf.if %8 {
      %cst_14 = arith.constant 0xFF800000 : f32
      %18 = vector.broadcast %cst_14 : f32 to vector<1x256xf32>
      %c0_15 = arith.constant 0 : index
      %c0_16 = arith.constant 0 : index
      %19 = vector.load %arg6[%c0_15, %c0_16] : memref<1x256xf32, #tpu.memory_space<vmem>>, vector<1x256xf32>
      tpu.vector_store %arg6[%c0_15, %c0_16], %18 {strides = array<i32>} : memref<1x256xf32, #tpu.memory_space<vmem>>, vector<1x256xf32>,
      %cst_17 = arith.constant 0.000000e+00 : f32
      %20 = vector.broadcast %cst_17 : f32 to vector<1x256xf32>
      %c0_18 = arith.constant 0 : index
      %c0_19 = arith.constant 0 : index
      %21 = vector.load %arg7[%c0_18, %c0_19] : memref<1x256xf32, #tpu.memory_space<vmem>>, vector<1x256xf32>
      tpu.vector_store %arg7[%c0_18, %c0_19], %20 {strides = array<i32>} : memref<1x256xf32, #tpu.memory_space<vmem>>, vector<1x256xf32>,
    } else {
    }
    %c0_4 = arith.constant 0 : index
    %c0_5 = arith.constant 0 : index
    %9 = vector.load %arg6[%c0_4, %c0_5] : memref<1x256xf32, #tpu.memory_space<vmem>>, vector<1x256xf32>
    %10 = arith.maximumf %9, %3 : vector<1x256xf32>
    %c0_6 = arith.constant 0 : index
    %c0_7 = arith.constant 0 : index
    %11 = vector.load %arg6[%c0_6, %c0_7] : memref<1x256xf32, #tpu.memory_space<vmem>>, vector<1x256xf32>
    tpu.vector_store %arg6[%c0_6, %c0_7], %10 {strides = array<i32>} : memref<1x256xf32, #tpu.memory_space<vmem>>, vector<1x256xf32>,
    %c0_8 = arith.constant 0 : index
    %c0_9 = arith.constant 0 : index
    %12 = vector.load %arg7[%c0_8, %c0_9] : memref<1x256xf32, #tpu.memory_space<vmem>>, vector<1x256xf32>
    %13 = arith.addf %12, %5 : vector<1x256xf32>
    %c0_10 = arith.constant 0 : index
    %c0_11 = arith.constant 0 : index
    %14 = vector.load %arg7[%c0_10, %c0_11] : memref<1x256xf32, #tpu.memory_space<vmem>>, vector<1x256xf32>
    tpu.vector_store %arg7[%c0_10, %c0_11], %13 {strides = array<i32>} : memref<1x256xf32, #tpu.memory_space<vmem>>, vector<1x256xf32>,
    %c0_i32_12 = arith.constant 0 : i32
    %15 = arith.cmpi eq, %arg1, %c0_i32_12 : i32
    %16 = arith.extui %15 : i1 to i32
    %c0_i32_13 = arith.constant 0 : i32
    %17 = arith.cmpi ne, %16, %c0_i32_13 : i32
    scf.if %17 {
      %c0_14 = arith.constant 0 : index
      %c0_15 = arith.constant 0 : index
      %18 = vector.load %arg6[%c0_14, %c0_15] : memref<1x256xf32, #tpu.memory_space<vmem>>, vector<1x256xf32>
      %c0_16 = arith.constant 0 : index
      %c0_17 = arith.constant 0 : index
      %19 = vector.load %arg7[%c0_16, %c0_17] : memref<1x256xf32, #tpu.memory_space<vmem>>, vector<1x256xf32>
      %cst_18 = arith.constant 2.500000e-01 : f32
      %20 = vector.broadcast %cst_18 : f32 to vector<1x256xf32>
      %21 = arith.mulf %19, %20 : vector<1x256xf32>
      %22 = tpu.concatenate %18, %21 in 0 : vector<1x256xf32>, vector<1x256xf32> -> vector<2x256xf32>
      %23 = tpu.iota {dimensions = array<i32: 1>} : vector<1x256xi32>
      %24 = arith.sitofp %23 : vector<1x256xi32> to vector<1x256xf32>
      %cst_19 = arith.constant 1.600000e+01 : f32
      %25 = vector.broadcast %cst_19 : f32 to vector<1x256xf32>
      %26 = arith.divf %24, %25 : vector<1x256xf32>
      %27 = math.floor %26 : vector<1x256xf32>
      %cst_20 = arith.constant 1.600000e+01 : f32
      %28 = vector.broadcast %cst_20 : f32 to vector<1x256xf32>
      %29 = arith.mulf %27, %28 : vector<1x256xf32>
      %30 = arith.subf %24, %29 : vector<1x256xf32>
      %cst_21 = arith.constant 0.000000e+00 : f32
      %31 = vector.broadcast %cst_21 : f32 to vector<1x256xf32>
      %cst_22 = arith.constant 5.000000e-01 : f32
      %32 = vector.broadcast %cst_22 : f32 to vector<1x256xf32>
      %33 = arith.cmpf oge, %27, %32 : vector<1x256xf32>
      %cst_23 = arith.constant 5.000000e-01 : f32
      %34 = vector.broadcast %cst_23 : f32 to vector<1x256xf32>
      %35 = arith.cmpf oge, %30, %34 : vector<1x256xf32>
      %36 = arith.andi %33, %35 : vector<1x256xi1>
      %c17_i32 = arith.constant 17 : i32
      %37 = tpu.dynamic_rotate %22 by %c17_i32 dim 1 : vector<2x256xf32>, i32 -> vector<2x256xf32>
      %c0_24 = arith.constant 0 : index
      %38 = memref.load %arg2[%c0_24] : memref<18xf32, #tpu.memory_space<smem>>
      %c9 = arith.constant 9 : index
      %39 = memref.load %arg2[%c9] : memref<18xf32, #tpu.memory_space<smem>>
      %40 = vector.extract_strided_slice %37 {offsets = [0, 0], sizes = [1, 256], strides = [1, 1]} : vector<2x256xf32> to vector<1x256xf32>
      %41 = vector.broadcast %38 : f32 to vector<1x256xf32>
      %42 = arith.mulf %41, %40 : vector<1x256xf32>
      %43 = vector.extract_strided_slice %37 {offsets = [1, 0], sizes = [1, 256], strides = [1, 1]} : vector<2x256xf32> to vector<1x256xf32>
      %44 = vector.broadcast %39 : f32 to vector<1x256xf32>
      %45 = arith.mulf %44, %43 : vector<1x256xf32>
      %46 = arith.addf %42, %45 : vector<1x256xf32>
      %cst_25 = arith.constant 0.000000e+00 : f32
      %47 = vector.broadcast %cst_25 : f32 to vector<1x256xf32>
      %48 = arith.select %36, %46, %47 : vector<1x256xi1>, vector<1x256xf32>
      %49 = arith.addf %31, %48 : vector<1x256xf32>
      %c16_i32 = arith.constant 16 : i32
      %50 = tpu.dynamic_rotate %22 by %c16_i32 dim 1 : vector<2x256xf32>, i32 -> vector<2x256xf32>
      %c1 = arith.constant 1 : index
      %51 = memref.load %arg2[%c1] : memref<18xf32, #tpu.memory_space<smem>>
      %c10 = arith.constant 10 : index
      %52 = memref.load %arg2[%c10] : memref<18xf32, #tpu.memory_space<smem>>
      %53 = vector.extract_strided_slice %50 {offsets = [0, 0], sizes = [1, 256], strides = [1, 1]} : vector<2x256xf32> to vector<1x256xf32>
      %54 = vector.broadcast %51 : f32 to vector<1x256xf32>
      %55 = arith.mulf %54, %53 : vector<1x256xf32>
      %56 = vector.extract_strided_slice %50 {offsets = [1, 0], sizes = [1, 256], strides = [1, 1]} : vector<2x256xf32> to vector<1x256xf32>
      %57 = vector.broadcast %52 : f32 to vector<1x256xf32>
      %58 = arith.mulf %57, %56 : vector<1x256xf32>
      %59 = arith.addf %55, %58 : vector<1x256xf32>
      %cst_26 = arith.constant 0.000000e+00 : f32
      %60 = vector.broadcast %cst_26 : f32 to vector<1x256xf32>
      %61 = arith.select %33, %59, %60 : vector<1x256xi1>, vector<1x256xf32>
      %62 = arith.addf %49, %61 : vector<1x256xf32>
      %cst_27 = arith.constant 1.450000e+01 : f32
      %63 = vector.broadcast %cst_27 : f32 to vector<1x256xf32>
      %64 = arith.cmpf ole, %30, %63 : vector<1x256xf32>
      %65 = arith.andi %33, %64 : vector<1x256xi1>
      %c15_i32 = arith.constant 15 : i32
      %66 = tpu.dynamic_rotate %22 by %c15_i32 dim 1 : vector<2x256xf32>, i32 -> vector<2x256xf32>
      %c2 = arith.constant 2 : index
      %67 = memref.load %arg2[%c2] : memref<18xf32, #tpu.memory_space<smem>>
      %c11 = arith.constant 11 : index
      %68 = memref.load %arg2[%c11] : memref<18xf32, #tpu.memory_space<smem>>
      %69 = vector.extract_strided_slice %66 {offsets = [0, 0], sizes = [1, 256], strides = [1, 1]} : vector<2x256xf32> to vector<1x256xf32>
      %70 = vector.broadcast %67 : f32 to vector<1x256xf32>
      %71 = arith.mulf %70, %69 : vector<1x256xf32>
      %72 = vector.extract_strided_slice %66 {offsets = [1, 0], sizes = [1, 256], strides = [1, 1]} : vector<2x256xf32> to vector<1x256xf32>
      %73 = vector.broadcast %68 : f32 to vector<1x256xf32>
      %74 = arith.mulf %73, %72 : vector<1x256xf32>
      %75 = arith.addf %71, %74 : vector<1x256xf32>
      %cst_28 = arith.constant 0.000000e+00 : f32
      %76 = vector.broadcast %cst_28 : f32 to vector<1x256xf32>
      %77 = arith.select %65, %75, %76 : vector<1x256xi1>, vector<1x256xf32>
      %78 = arith.addf %62, %77 : vector<1x256xf32>
      %cst_29 = arith.constant 5.000000e-01 : f32
      %79 = vector.broadcast %cst_29 : f32 to vector<1x256xf32>
      %80 = arith.cmpf oge, %30, %79 : vector<1x256xf32>
      %c1_i32 = arith.constant 1 : i32
      %81 = tpu.dynamic_rotate %22 by %c1_i32 dim 1 : vector<2x256xf32>, i32 -> vector<2x256xf32>
      %c3 = arith.constant 3 : index
      %82 = memref.load %arg2[%c3] : memref<18xf32, #tpu.memory_space<smem>>
      %c12 = arith.constant 12 : index
      %83 = memref.load %arg2[%c12] : memref<18xf32, #tpu.memory_space<smem>>
      %84 = vector.extract_strided_slice %81 {offsets = [0, 0], sizes = [1, 256], strides = [1, 1]} : vector<2x256xf32> to vector<1x256xf32>
      %85 = vector.broadcast %82 : f32 to vector<1x256xf32>
      %86 = arith.mulf %85, %84 : vector<1x256xf32>
      %87 = vector.extract_strided_slice %81 {offsets = [1, 0], sizes = [1, 256], strides = [1, 1]} : vector<2x256xf32> to vector<1x256xf32>
      %88 = vector.broadcast %83 : f32 to vector<1x256xf32>
      %89 = arith.mulf %88, %87 : vector<1x256xf32>
      %90 = arith.addf %86, %89 : vector<1x256xf32>
      %cst_30 = arith.constant 0.000000e+00 : f32
      %91 = vector.broadcast %cst_30 : f32 to vector<1x256xf32>
      %92 = arith.select %80, %90, %91 : vector<1x256xi1>, vector<1x256xf32>
      %93 = arith.addf %78, %92 : vector<1x256xf32>
      %c4 = arith.constant 4 : index
      %94 = memref.load %arg2[%c4] : memref<18xf32, #tpu.memory_space<smem>>
      %c13 = arith.constant 13 : index
      %95 = memref.load %arg2[%c13] : memref<18xf32, #tpu.memory_space<smem>>
      %96 = vector.extract_strided_slice %22 {offsets = [0, 0], sizes = [1, 256], strides = [1, 1]} : vector<2x256xf32> to vector<1x256xf32>
      %97 = vector.broadcast %94 : f32 to vector<1x256xf32>
      %98 = arith.mulf %97, %96 : vector<1x256xf32>
      %99 = vector.extract_strided_slice %22 {offsets = [1, 0], sizes = [1, 256], strides = [1, 1]} : vector<2x256xf32> to vector<1x256xf32>
      %100 = vector.broadcast %95 : f32 to vector<1x256xf32>
      %101 = arith.mulf %100, %99 : vector<1x256xf32>
      %102 = arith.addf %98, %101 : vector<1x256xf32>
      %103 = arith.addf %93, %102 : vector<1x256xf32>
      %cst_31 = arith.constant 1.450000e+01 : f32
      %104 = vector.broadcast %cst_31 : f32 to vector<1x256xf32>
      %105 = arith.cmpf ole, %30, %104 : vector<1x256xf32>
      %c255_i32 = arith.constant 255 : i32
      %106 = tpu.dynamic_rotate %22 by %c255_i32 dim 1 : vector<2x256xf32>, i32 -> vector<2x256xf32>
      %c5 = arith.constant 5 : index
      %107 = memref.load %arg2[%c5] : memref<18xf32, #tpu.memory_space<smem>>
      %c14 = arith.constant 14 : index
      %108 = memref.load %arg2[%c14] : memref<18xf32, #tpu.memory_space<smem>>
      %109 = vector.extract_strided_slice %106 {offsets = [0, 0], sizes = [1, 256], strides = [1, 1]} : vector<2x256xf32> to vector<1x256xf32>
      %110 = vector.broadcast %107 : f32 to vector<1x256xf32>
      %111 = arith.mulf %110, %109 : vector<1x256xf32>
      %112 = vector.extract_strided_slice %106 {offsets = [1, 0], sizes = [1, 256], strides = [1, 1]} : vector<2x256xf32> to vector<1x256xf32>
      %113 = vector.broadcast %108 : f32 to vector<1x256xf32>
      %114 = arith.mulf %113, %112 : vector<1x256xf32>
      %115 = arith.addf %111, %114 : vector<1x256xf32>
      %cst_32 = arith.constant 0.000000e+00 : f32
      %116 = vector.broadcast %cst_32 : f32 to vector<1x256xf32>
      %117 = arith.select %105, %115, %116 : vector<1x256xi1>, vector<1x256xf32>
      %118 = arith.addf %103, %117 : vector<1x256xf32>
      %cst_33 = arith.constant 1.450000e+01 : f32
      %119 = vector.broadcast %cst_33 : f32 to vector<1x256xf32>
      %120 = arith.cmpf ole, %27, %119 : vector<1x256xf32>
      %cst_34 = arith.constant 5.000000e-01 : f32
      %121 = vector.broadcast %cst_34 : f32 to vector<1x256xf32>
      %122 = arith.cmpf oge, %30, %121 : vector<1x256xf32>
      %123 = arith.andi %120, %122 : vector<1x256xi1>
      %c241_i32 = arith.constant 241 : i32
      %124 = tpu.dynamic_rotate %22 by %c241_i32 dim 1 : vector<2x256xf32>, i32 -> vector<2x256xf32>
      %c6 = arith.constant 6 : index
      %125 = memref.load %arg2[%c6] : memref<18xf32, #tpu.memory_space<smem>>
      %c15 = arith.constant 15 : index
      %126 = memref.load %arg2[%c15] : memref<18xf32, #tpu.memory_space<smem>>
      %127 = vector.extract_strided_slice %124 {offsets = [0, 0], sizes = [1, 256], strides = [1, 1]} : vector<2x256xf32> to vector<1x256xf32>
      %128 = vector.broadcast %125 : f32 to vector<1x256xf32>
      %129 = arith.mulf %128, %127 : vector<1x256xf32>
      %130 = vector.extract_strided_slice %124 {offsets = [1, 0], sizes = [1, 256], strides = [1, 1]} : vector<2x256xf32> to vector<1x256xf32>
      %131 = vector.broadcast %126 : f32 to vector<1x256xf32>
      %132 = arith.mulf %131, %130 : vector<1x256xf32>
      %133 = arith.addf %129, %132 : vector<1x256xf32>
      %cst_35 = arith.constant 0.000000e+00 : f32
      %134 = vector.broadcast %cst_35 : f32 to vector<1x256xf32>
      %135 = arith.select %123, %133, %134 : vector<1x256xi1>, vector<1x256xf32>
      %136 = arith.addf %118, %135 : vector<1x256xf32>
      %c240_i32 = arith.constant 240 : i32
      %137 = tpu.dynamic_rotate %22 by %c240_i32 dim 1 : vector<2x256xf32>, i32 -> vector<2x256xf32>
      %c7 = arith.constant 7 : index
      %138 = memref.load %arg2[%c7] : memref<18xf32, #tpu.memory_space<smem>>
      %c16 = arith.constant 16 : index
      %139 = memref.load %arg2[%c16] : memref<18xf32, #tpu.memory_space<smem>>
      %140 = vector.extract_strided_slice %137 {offsets = [0, 0], sizes = [1, 256], strides = [1, 1]} : vector<2x256xf32> to vector<1x256xf32>
      %141 = vector.broadcast %138 : f32 to vector<1x256xf32>
      %142 = arith.mulf %141, %140 : vector<1x256xf32>
      %143 = vector.extract_strided_slice %137 {offsets = [1, 0], sizes = [1, 256], strides = [1, 1]} : vector<2x256xf32> to vector<1x256xf32>
      %144 = vector.broadcast %139 : f32 to vector<1x256xf32>
      %145 = arith.mulf %144, %143 : vector<1x256xf32>
      %146 = arith.addf %142, %145 : vector<1x256xf32>
      %cst_36 = arith.constant 0.000000e+00 : f32
      %147 = vector.broadcast %cst_36 : f32 to vector<1x256xf32>
      %148 = arith.select %120, %146, %147 : vector<1x256xi1>, vector<1x256xf32>
      %149 = arith.addf %136, %148 : vector<1x256xf32>
      %cst_37 = arith.constant 1.450000e+01 : f32
      %150 = vector.broadcast %cst_37 : f32 to vector<1x256xf32>
      %151 = arith.cmpf ole, %30, %150 : vector<1x256xf32>
      %152 = arith.andi %120, %151 : vector<1x256xi1>
      %c239_i32 = arith.constant 239 : i32
      %153 = tpu.dynamic_rotate %22 by %c239_i32 dim 1 : vector<2x256xf32>, i32 -> vector<2x256xf32>
      %c8 = arith.constant 8 : index
      %154 = memref.load %arg2[%c8] : memref<18xf32, #tpu.memory_space<smem>>
      %c17 = arith.constant 17 : index
      %155 = memref.load %arg2[%c17] : memref<18xf32, #tpu.memory_space<smem>>
      %156 = vector.extract_strided_slice %153 {offsets = [0, 0], sizes = [1, 256], strides = [1, 1]} : vector<2x256xf32> to vector<1x256xf32>
      %157 = vector.broadcast %154 : f32 to vector<1x256xf32>
      %158 = arith.mulf %157, %156 : vector<1x256xf32>
      %159 = vector.extract_strided_slice %153 {offsets = [1, 0], sizes = [1, 256], strides = [1, 1]} : vector<2x256xf32> to vector<1x256xf32>
      %160 = vector.broadcast %155 : f32 to vector<1x256xf32>
      %161 = arith.mulf %160, %159 : vector<1x256xf32>
      %162 = arith.addf %158, %161 : vector<1x256xf32>
      %cst_38 = arith.constant 0.000000e+00 : f32
      %163 = vector.broadcast %cst_38 : f32 to vector<1x256xf32>
      %164 = arith.select %152, %162, %163 : vector<1x256xi1>, vector<1x256xf32>
      %165 = arith.addf %149, %164 : vector<1x256xf32>
      %c0_39 = arith.constant 0 : index
      %166 = memref.load %arg3[%c0_39] : memref<1xf32, #tpu.memory_space<smem>>
      %167 = vector.broadcast %166 : f32 to vector<1x256xf32>
      %168 = arith.addf %165, %167 : vector<1x256xf32>
      %169 = arith.negf %168 : vector<1x256xf32>
      %170 = math.exp %169 : vector<1x256xf32>
      %cst_40 = arith.constant 1.000000e+00 : f32
      %171 = vector.broadcast %cst_40 : f32 to vector<1x256xf32>
      %172 = arith.addf %171, %170 : vector<1x256xf32>
      %173 = arith.divf %171, %172 : vector<1x256xf32>
      %c0_41 = arith.constant 0 : index
      %c0_42 = arith.constant 0 : index
      %c0_43 = arith.constant 0 : index
      %174 = vector.load %arg5[%c0_41, %c0_42, %c0_43] : memref<1x1x256xf32, #tpu.memory_space<vmem>>, vector<1x1x256xf32>
      %175 = vector.shape_cast %174 : vector<1x1x256xf32> to vector<1x256xf32>
      %176 = vector.shape_cast %173 : vector<1x256xf32> to vector<1x1x256xf32>
      tpu.vector_store %arg5[%c0_41, %c0_42, %c0_43], %176 {strides = array<i32>} : memref<1x1x256xf32, #tpu.memory_space<vmem>>, vector<1x1x256xf32>,
    } else {
    }
    return
  }
  func.func @transform_0(%arg0: i32, %arg1: i32) -> i32 {
    %c0_i32 = arith.constant 0 : i32
    %c0_i32_0 = arith.constant 0 : i32
    return %c0_i32 : i32
  }
  func.func @transform_1(%arg0: i32, %arg1: i32) -> i32 {
    %c0_i32 = arith.constant 0 : i32
    %c0_i32_0 = arith.constant 0 : i32
    return %c0_i32 : i32
  }
  func.func @transform_2(%arg0: i32, %arg1: i32) -> (i32, i32, i32) {
    %c0_i32 = arith.constant 0 : i32
    %c0_i32_0 = arith.constant 0 : i32
    return %arg0, %arg1, %c0_i32 : i32, i32, i32
  }
  func.func @transform_3(%arg0: i32, %arg1: i32) -> (i32, i32, i32) {
    %c0_i32 = arith.constant 0 : i32
    %c0_i32_0 = arith.constant 0 : i32
    %c0_i32_1 = arith.constant 0 : i32
    return %arg0, %c0_i32, %c0_i32_0 : i32, i32, i32
  }
}

</mosaic_0001>

<llo_original>
// kernel: tpu_custom_call.1
$region0: #{tpu_custom_call.1}
  #allocation0 [shape = 'u32[]', space=smem, size = 0x4, offset = 0x4, fixed_abs, tag = 'smem constant byte address 0x4 - core index']
  #allocation1 [shape = 'u32[144,128]{1,0:T(1,128)}', space=vmem, size = 0x12000, scoped, tag = 'internal scratch']
  #allocation2 [shape = 'f32[1,256]{1,0:T(1,128)}', space=vmem, size = 0x400, scoped, tag = 'scratch operand']
  #allocation3 [shape = 'f32[1,256]{1,0:T(1,128)}', space=vmem, size = 0x400, scoped, tag = 'scratch operand']
  #allocation4 [shape = 'f32[1]{0:T(128)S(6)}', space=smem, size = 0x200, scoped, tag = 'scoped memory for tpu_custom_call.1']
  %s0 = inlined_call_operand.vmem [shape: f32[18], index: 0, kind: input, shape index: {}]
  %s1 = inlined_call_operand.<no memory space> [shape: f32[1], index: 1, kind: input, shape index: {}]
  %s2 = inlined_call_operand.hbm [shape: f32[2,4,256], index: 2, kind: input, shape index: {}]
  %s3 = inlined_call_operand.hbm [shape: f32[2,1,256], index: 3, kind: output, shape index: {}]
  %s4 = sld [smem:[#allocation0]]
  $region61: #{tpu_custom_call.1} parent=0
    _
  %s6 = ssub.s32 1, %s4
  %s7 = scalar_select 0, %s6, %s4
  %8 = sst [smem:[#allocation4]] %s1
  $region1: #{tpu_custom_call.1} parent=0
    #allocation5 [shape = 'u8[512]{0}', space=smem, size = 0x200, scoped, tag = 'input window, operand 0, single buffered']
    #allocation6 [shape = 's32[2]{0}', space=sflag, size = 0x8, scoped, tag = 'scoped memory for tpu_custom_call.1']
    #allocation7 [shape = 's32[2]{0}', space=sflag, size = 0x8, scoped, tag = 'scoped memory for tpu_custom_call.1']
    #allocation8 [shape = 's32[2]{0}', space=sflag, size = 0x8, scoped, tag = 'scoped memory for tpu_custom_call.1']
    #allocation9 [shape = 'u8[8192]{0}', space=vmem, size = 0x2000, scoped, tag = 'input window, operand 2']
    #allocation10 [shape = 'u8[2048]{0}', space=vmem, size = 0x800, scoped, tag = 'output window, operand 0']
    %9 = vsyncpa [#allocation8], 0
    %10 = vsyncpa [#allocation6], 0
    %s11 = scalar_lea.sflag [#allocation6], 1
    %12 = vsyncpa %s11, 0
    %13 = vsyncpa [#allocation7], 0
    %s14 = scalar_lea.sflag [#allocation7], 1
    %15 = vsyncpa %s14, 0
    loop: start=0, step=1, limit=4
    $region2: #{tpu_custom_call.1} parent=1 // loop_pre_header
      _
    $region3: #{tpu_custom_call.1} parent=1 // loop_header
      %s17 = sphi 0, %s21
      %p18 = scmp.ge.s32.totalorder %s17, 4
      %s24 = sphi 0, %s36
      %s25 = sphi 0, %s32
      %s26 = sphi 0, %s24
      %s27 = sphi 0, %s25
      %s28 = sphi 0, %s26
      %s29 = sphi 0, %s27
      %s37 = sphi 0, %s37
      %s39 = sphi 0, %s37
      %s40 = sphi 0, %s39
      %s54 = sphi 0, %s40
      %s58 = sphi 0, %s58
      %s60 = sphi 0, %s58
      %s61 = sphi 0, %s60
      %s75 = sphi 0, %s61
      %s83 = sphi 0, %s85
      %s86 = sphi 0, %s83
      %s87 = sphi 0, %s86
      %s103 = sphi 0, %s87
      %s109 = sphi 0, %s111
      %s112 = sphi 0, %s109
      %s113 = sphi 0, %s112
      %s129 = sphi 0, %s113
    $region4: #{tpu_custom_call.1} parent=1 // loop_header_branch
      %20 = sbr.rel (%p18) target = $region8
    $region5: #{tpu_custom_call.1} parent=1 // loop_body
      %s22 = ssub.s32 %s17, 1
      %s23 = ssub.s32 %s17, 2
      %s30 = sadd.s32 1, %s25
      %p31 = scmp.ge.s32.totalorder %s30, 1
      %s32 = scalar_select %p31, 0, %s30
      %s33 = sadd.s32 1, %s24
      %s34 = scalar_select %p31, %s33, %s24
      %p35 = scmp.ge.s32.totalorder %s34, 2
      %s36 = scalar_select %p35, 0, %s34
      %s38 = sadd.s32 %s37, 1
      %p41 = scmp.eq.s32.totalorder %s17, 1
      %p42 = scmp.ne.s32.totalorder %s37, %s39
      %p43 = scmp.eq.s32.totalorder %s17, 0
      %p44 = por %p42, %p43
      %p45 = scmp.ne.s32.totalorder %s37, %s39
      %p46 = scmp.eq.s32.totalorder %s22, 1
      %p47 = por %p45, %p46
      %p48 = scmp.ne.s32.totalorder %s39, %s40
      %p49 = scmp.eq.s32.totalorder %s22, 0
      %p50 = por %p48, %p49
      %p51 = scmp.ne.s32.totalorder %s39, %s40
      %p52 = scmp.eq.s32.totalorder %s23, 1
      %p53 = por %p51, %p52
      %p55 = scmp.ne.s32.totalorder %s40, %s54
      %p56 = scmp.eq.s32.totalorder %s23, 0
      %p57 = por %p55, %p56
      %s59 = sadd.s32 %s58, 1
      %p62 = scmp.eq.s32.totalorder %s17, 1
      %p63 = scmp.ne.s32.totalorder %s58, %s60
      %p64 = scmp.eq.s32.totalorder %s17, 0
      %p65 = por %p63, %p64
      %p66 = scmp.ne.s32.totalorder %s58, %s60
      %p67 = scmp.eq.s32.totalorder %s22, 1
      %p68 = por %p66, %p67
      %p69 = scmp.ne.s32.totalorder %s60, %s61
      %p70 = scmp.eq.s32.totalorder %s22, 0
      %p71 = por %p69, %p70
      %p72 = scmp.ne.s32.totalorder %s60, %s61
      %p73 = scmp.eq.s32.totalorder %s23, 1
      %p74 = por %p72, %p73
      %p76 = scmp.ne.s32.totalorder %s61, %s75
      %p77 = scmp.eq.s32.totalorder %s23, 0
      %p78 = por %p76, %p77
      %s79 = ssub.s32 %s24, %s36
      %s80 = ssub.s32 %s25, %s32
      %s81 = sor.u32 %s79, %s80
      %p82 = scmp.eq.s32.totalorder %s81, 0
      %s84 = sadd.s32 %s83, 1
      %s85 = scalar_select %p82, %s83, %s84
      %p88 = pneg %p82
      %p89 = scmp.eq.s32.totalorder %s17, 1
      %p90 = por %p88, %p89
      %p91 = scmp.ne.s32.totalorder %s83, %s86
      %p92 = scmp.eq.s32.totalorder %s17, 0
      %p93 = por %p91, %p92
      %p94 = scmp.ne.s32.totalorder %s83, %s86
      %p95 = scmp.eq.s32.totalorder %s22, 1
      %p96 = por %p94, %p95
      %p97 = scmp.ne.s32.totalorder %s86, %s87
      %p98 = scmp.eq.s32.totalorder %s22, 0
      %p99 = por %p97, %p98
      %p100 = scmp.ne.s32.totalorder %s86, %s87
      %p101 = scmp.eq.s32.totalorder %s23, 1
      %p102 = por %p100, %p101
      %p104 = scmp.ne.s32.totalorder %s87, %s103
      %p105 = scmp.eq.s32.totalorder %s23, 0
      %p106 = por %p104, %p105
      %s107 = ssub.s32 %s24, %s36
      %p108 = scmp.eq.s32.totalorder %s107, 0
      %s110 = sadd.s32 %s109, 1
      %s111 = scalar_select %p108, %s109, %s110
      %p114 = pneg %p108
      %p115 = scmp.eq.s32.totalorder %s17, 1
      %p116 = por %p114, %p115
      %p117 = scmp.ne.s32.totalorder %s109, %s112
      %p118 = scmp.eq.s32.totalorder %s17, 0
      %p119 = por %p117, %p118
      %p120 = scmp.ne.s32.totalorder %s109, %s112
      %p121 = scmp.eq.s32.totalorder %s22, 1
      %p122 = por %p120, %p121
      %p123 = scmp.ne.s32.totalorder %s112, %s113
      %p124 = scmp.eq.s32.totalorder %s22, 0
      %p125 = por %p123, %p124
      %p126 = scmp.ne.s32.totalorder %s112, %s113
      %p127 = scmp.eq.s32.totalorder %s23, 1
      %p128 = por %p126, %p127
      %p130 = scmp.ne.s32.totalorder %s113, %s129
      %p131 = scmp.eq.s32.totalorder %s23, 0
      %p132 = por %p130, %p131
      %p133 = scmp.le.s32.totalorder 1, %s17
      %p134 = scmp.lt.s32.totalorder %s17, 3
      %p135 = pnand %p133, %p134
      %p136 = pneg %p135
      // Predicated region
      $region9: #{tpu_custom_call.1} parent=5 // pred_check
        _
      $region10: #{tpu_custom_call.1} parent=5 // pred_check_branch
        %138 = sbr.rel (%p135) target = $region12
      $region11: #{tpu_custom_call.1} parent=5 // pred_region
        %s139 = ssub.s32 %s17, 1
        // Predicated region
        $region13: #{tpu_custom_call.1} parent=11 // pred_check
          %p140 = pneg %p50
        $region14: #{tpu_custom_call.1} parent=11 // pred_check_branch
          %142 = sbr.rel (%p140) target = $region16
        $region15: #{tpu_custom_call.1} parent=11 // pred_region
          %s144 = ssub.s32 16, 16
          %145 = vsyncadd [#allocation8], %s144
          %s147 = sshll.u32 %s0, 4
          %s148 = int_to_ptr.vmem [resolvable:$true] %s147
          %150 = dma.vmem_to_smem %s148, 16, [#allocation5], [#allocation8]
        $region16: #{tpu_custom_call.1} parent=11 // pred_fallthru
          _
        // Predicated region
        $region17: #{tpu_custom_call.1} parent=11 // pred_check
          %p151 = pneg %p71
        $region18: #{tpu_custom_call.1} parent=11 // pred_check_branch
          %153 = sbr.rel (%p151) target = $region20
        $region19: #{tpu_custom_call.1} parent=11 // pred_region
          _
        $region20: #{tpu_custom_call.1} parent=11 // pred_fallthru
          _
      $region12: #{tpu_custom_call.1} parent=5 // pred_fallthru
        _
      %p154 = scmp.lt.s32.totalorder %s17, 2
      // Predicated region
      $region21: #{tpu_custom_call.1} parent=5 // pred_check
        %p155 = pneg %p154
      $region22: #{tpu_custom_call.1} parent=5 // pred_check_branch
        %157 = sbr.rel (%p155) target = $region24
      $region23: #{tpu_custom_call.1} parent=5 // pred_region
        // Predicated region
        $region25: #{tpu_custom_call.1} parent=23 // pred_check
          %p158 = pneg %p93
        $region26: #{tpu_custom_call.1} parent=23 // pred_check_branch
          %160 = sbr.rel (%p158) target = $region28
        $region27: #{tpu_custom_call.1} parent=23 // pred_region
          %s161 = sand.u32 %s83, 1
          %s162 = scalar_lea.sflag [#allocation6], %s161
          %s163 = sand.u32 %s83, 1
          %s164 = smul.addr %s163, 8
          %s165 = scalar_lea.vmem [#allocation9], %s164
          %s167 = ssub.s32 128, 128
          %168 = vsyncadd %s162, %s167
          %s169 = smul.addr %s25, 2
          %s170 = smul.addr %s24, 2
          %s171 = sadd.s32 %s169, %s170
          %s172 = smul.addr %s171, 64
          %s173 = scalar_lea.hbm %s2, %s172
          %s175 = sshll.u32 %s165, 4
          %s176 = int_to_ptr.vmem [resolvable:$true] %s175
          %178 = dma.hbm_to_vmem [thread:$0]  %s173, 128, %s176, %s162
        $region28: #{tpu_custom_call.1} parent=23 // pred_fallthru
          _
      $region24: #{tpu_custom_call.1} parent=5 // pred_fallthru
        _
      %p179 = scmp.le.s32.totalorder 1, %s17
      %p180 = scmp.lt.s32.totalorder %s17, 3
      %p181 = pnand %p179, %p180
      %p182 = pneg %p181
      // Predicated region
      $region29: #{tpu_custom_call.1} parent=5 // pred_check
        _
      $region30: #{tpu_custom_call.1} parent=5 // pred_check_branch
        %184 = sbr.rel (%p181) target = $region32
      $region31: #{tpu_custom_call.1} parent=5 // pred_region
        %s185 = ssub.s32 %s17, 1
        // Predicated region
        $region33: #{tpu_custom_call.1} parent=31 // pred_check
          %p186 = pneg %p50
        $region34: #{tpu_custom_call.1} parent=31 // pred_check_branch
          %188 = sbr.rel (%p186) target = $region36
        $region35: #{tpu_custom_call.1} parent=31 // pred_region
          %189 = dma.done [#allocation8], 16
        $region36: #{tpu_custom_call.1} parent=31 // pred_fallthru
          _
        %s190 = sand.u32 %s86, 1
        %s191 = scalar_lea.sflag [#allocation6], %s190
        %s192 = sand.u32 %s86, 1
        %s193 = smul.addr %s192, 8
        %s194 = scalar_lea.vmem [#allocation9], %s193
        // Predicated region
        $region37: #{tpu_custom_call.1} parent=31 // pred_check
          %p195 = pneg %p99
        $region38: #{tpu_custom_call.1} parent=31 // pred_check_branch
          %197 = sbr.rel (%p195) target = $region40
        $region39: #{tpu_custom_call.1} parent=31 // pred_region
          %198 = dma.done %s191, 128
        $region40: #{tpu_custom_call.1} parent=31 // pred_fallthru
          _
        %199 = sfence
        %p200 = pneg %p50
        %p201 = pneg %p47
        %p202 = pneg %p71
        %p203 = pneg %p68
        %s204 = sand.u32 %s86, 1
        %s205 = scalar_lea.sflag [#allocation6], %s204
        %s206 = sand.u32 %s86, 1
        %s207 = smul.addr %s206, 8
        %s208 = scalar_lea.vmem [#allocation9], %s207
        %p209 = pneg %p99
        %p210 = pneg %p96
        %p211 = pneg %p125
        %p212 = pneg %p122
        %s213 = sand.u32 %s112, 1
        %s214 = scalar_lea.sflag [#allocation7], %s213
        %s215 = sand.u32 %s112, 1
        %s216 = smul.addr %s215, 2
        %s217 = scalar_lea.vmem [#allocation10], %s216
        %v218 = vld [vmem:[%s194] sm:$0xff]
        %v220 = vcombine.high %v218, %v218
        %vm222 = vcmask 1043456
        %v223 = vsel %vm222, %v218, -inf
        %v224 = vrot.slane %v223, 4
        %v225 = vmax.f32 %v223, %v224
        %v226 = vrot.slane %v225, 2
        %v227 = vmax.f32 %v225, %v226
        %v228 = vrot.slane %v227, 1
        %v229 = vmax.f32 %v227, %v228
        %v230 = vsel %vm222, %v220, -inf
        %v231 = vrot.slane %v230, 4
        %v232 = vmax.f32 %v230, %v231
        %v233 = vrot.slane %v232, 2
        %v234 = vmax.f32 %v232, %v233
        %v235 = vrot.slane %v234, 1
        %v236 = vmax.f32 %v234, %v235
        %v237 = vsel %vm222, %v218, 0.0
        %v238 = vrot.slane %v237, 4
        %v239 = vadd.f32 %v237, %v238
        %v240 = vrot.slane %v239, 2
        %v241 = vadd.f32 %v239, %v240
        %v242 = vrot.slane %v241, 1
        %v243 = vadd.f32 %v241, %v242
        %v244 = vsel %vm222, %v220, 0.0
        %v245 = vrot.slane %v244, 4
        %v246 = vadd.f32 %v244, %v245
        %v247 = vrot.slane %v246, 2
        %v248 = vadd.f32 %v246, %v247
        %v249 = vrot.slane %v248, 1
        %v250 = vadd.f32 %v248, %v249
        %p251 = scmp.eq.s32.totalorder %s27, 0
        // Predicated region
        $region41: #{tpu_custom_call.1} parent=31 // pred_check
          %p252 = pneg %p251
        $region42: #{tpu_custom_call.1} parent=31 // pred_check_branch
          %254 = sbr.rel (%p252) target = $region44
        $region43: #{tpu_custom_call.1} parent=31 // pred_region
          %v255 = vlaneseq
          %vm256 = vcmp.ge.s32.totalorder %v255, 0
          %vm257 = vcmp.lt.s32.totalorder %v255, 256
          %vm258 = vmand %vm256, %vm257
          %259 = vst.msk [vmem:[#allocation2] sm:$0x3] %vm258, -inf
          %260 = vst.msk [vmem:[#allocation3] sm:$0x3] %vm258, 0.0
        $region44: #{tpu_custom_call.1} parent=31 // pred_fallthru
          _
        %v261 = vld [vmem:[#allocation2] sm:$0x3]
        %v264 = vcombine.low %v229, %v236
        %v266 = vunpack.c.l.s4 1966171168
        %v267 = vunpack.c.0.s8 %v266
        %v268 = vlaneseq
        %v269 = vshrl.u32 %v268, 7
        %v270 = vsub.s32 %v267, %v269
        %v271 = vrot.slane %v264, %v270
        %v273 = vunpack.c.l.s4 1966171168
        %v274 = vunpack.c.0.s8 %v273
        %v275 = vlaneseq
        %v276 = vshrl.u32 %v275, 7
        %v277 = vsub.s32 %v274, %v276
        %v278 = vrot.slane %v271, %v277
        %v280 = vmax.f32 %v261, %v278
        %v281 = vlaneseq
        %vm282 = vcmp.ge.s32.totalorder %v281, 0
        %vm283 = vcmp.lt.s32.totalorder %v281, 256
        %vm284 = vmand %vm282, %vm283
        %285 = vst.msk [vmem:[#allocation2] sm:$0x3] %vm284, %v280
        %v286 = vld [vmem:[#allocation3] sm:$0x3]
        %v289 = vcombine.low %v243, %v250
        %v291 = vunpack.c.l.s4 1966171168
        %v292 = vunpack.c.0.s8 %v291
        %v293 = vlaneseq
        %v294 = vshrl.u32 %v293, 7
        %v295 = vsub.s32 %v292, %v294
        %v296 = vrot.slane %v289, %v295
        %v298 = vunpack.c.l.s4 1966171168
        %v299 = vunpack.c.0.s8 %v298
        %v300 = vlaneseq
        %v301 = vshrl.u32 %v300, 7
        %v302 = vsub.s32 %v299, %v301
        %v303 = vrot.slane %v296, %v302
        %v305 = vadd.f32 %v286, %v303
        %306 = vst.msk [vmem:[#allocation3] sm:$0x3] %vm284, %v305
        // Predicated region
        $region45: #{tpu_custom_call.1} parent=31 // pred_check
          %p307 = pneg %p251
        $region46: #{tpu_custom_call.1} parent=31 // pred_check_branch
          %309 = sbr.rel (%p307) target = $region48
        $region47: #{tpu_custom_call.1} parent=31 // pred_region
          %v310 = vld [vmem:[#allocation2] sm:$0x3]
          %v311 = vld [vmem:[#allocation3] sm:$0x3]
          %v312 = vmul.f32 %v311, 0.25
          %v314 = vlaneseq
          %v315 = vshrl.u32 %v314, 7
          %v316 = vsub.s32 0, %v315
          %v317 = vrot.slane %v310, %v316
          %v318 = vlaneseq
          %v319 = vshrl.u32 %v318, 7
          %v320 = vsub.s32 1, %v319
          %v321 = vrot.slane %v310, %v320
          %v325 = vlaneseq
          %v326 = vshrl.u32 %v325, 7
          %v327 = vsub.s32 0, %v326
          %v328 = vrot.slane %v312, %v327
          %v329 = vlaneseq
          %v330 = vshrl.u32 %v329, 7
          %v331 = vsub.s32 1, %v330
          %v332 = vrot.slane %v312, %v331
          %vm335 = vcmask 1040384
          %v336 = vsel %vm335, %v317, %v328
          %v337 = vsel %vm335, %v321, %v332
          %v338 = vlaneseq
          %v339 = vand.u32 %v338, 127
          %v340 = vadd.s32 %v339, 128
          %v341 = vcvt.s32.f32 %v339
          %v342 = vcvt.s32.f32 %v340
          %v343 = vrcp.pop 16.0
          %v344 = vmul.f32 %v341, %v343
          %v345 = vmul.f32 %v342, %v343
          %v346 = vfloor.f32 %v344
          %v347 = vfloor.f32 %v345
          %v348 = vmul.f32 %v346, 16.0
          %v349 = vmul.f32 %v347, 16.0
          %v350 = vsub.f32 %v341, %v348
          %v351 = vsub.f32 %v342, %v349
          %vm352 = vcmp.ge.f32.partialorder %v346, 0.5
          %vm353 = vcmp.ge.f32.partialorder %v347, 0.5
          %vm354 = vcmp.ge.f32.partialorder %v350, 0.5
          %vm355 = vcmp.ge.f32.partialorder %v351, 0.5
          %vm356 = vmand %vm352, %vm354
          %vm357 = vmand %vm353, %vm355
          %358 = vrot.lane.b32.xlu0 %v336, 17
          %v359 = vpop.permute.xlu0 %358
          %360 = vrot.lane.b32.xlu0 %v337, 17
          %v361 = vpop.permute.xlu0 %360
          %vm362 = vcmp.lt.s32.totalorder %v339, 17
          %v363 = vsel %vm362, %v359, %v361
          %v364 = vsel %vm362, %v361, %v359
          %s365 = sld [smem:[#allocation5]]
          %s366 = sld [smem:[#allocation5 + $0x9]]
          %v367 = vstv %s365
          %v368 = vmul.f32 %v367, %v364
          %v369 = vmul.f32 %v367, %v363
          %v370 = vstv %s366
          %v371 = vmul.f32 %v370, %v364
          %v372 = vmul.f32 %v370, %v363
          %v375 = vrot.slane %v371, 1
          %v376 = vrot.slane %v372, 1
          %v379 = vadd.f32 %v368, %v375
          %v380 = vadd.f32 %v369, %v376
          %v381 = vsel %vm356, %v379, 0.0
          %v382 = vsel %vm357, %v380, 0.0
          %v383 = vadd.f32 %v381, 0.0
          %v384 = vadd.f32 %v382, 0.0
          %385 = vrot.lane.b32.xlu0 %v336, 16
          %v386 = vpop.permute.xlu0 %385
          %387 = vrot.lane.b32.xlu0 %v337, 16
          %v388 = vpop.permute.xlu0 %387
          %vm389 = vcmp.lt.s32.totalorder %v339, 16
          %v390 = vsel %vm389, %v386, %v388
          %v391 = vsel %vm389, %v388, %v386
          %s392 = sld [smem:[#allocation5 + $0x1]]
          %s393 = sld [smem:[#allocation5 + $0xa]]
          %v394 = vstv %s392
          %v395 = vmul.f32 %v394, %v391
          %v396 = vmul.f32 %v394, %v390
          %v397 = vstv %s393
          %v398 = vmul.f32 %v397, %v391
          %v399 = vmul.f32 %v397, %v390
          %v402 = vrot.slane %v398, 1
          %v403 = vrot.slane %v399, 1
          %v406 = vadd.f32 %v395, %v402
          %v407 = vadd.f32 %v396, %v403
          %v408 = vsel %vm352, %v406, 0.0
          %v409 = vsel %vm353, %v407, 0.0
          %v410 = vadd.f32 %v383, %v408
          %v411 = vadd.f32 %v384, %v409
          %vm412 = vcmp.le.f32.partialorder %v350, 14.5
          %vm413 = vcmp.le.f32.partialorder %v351, 14.5
          %vm414 = vmand %vm352, %vm412
          %vm415 = vmand %vm353, %vm413
          %416 = vrot.lane.b32.xlu0 %v336, 15
          %v417 = vpop.permute.xlu0 %416
          %418 = vrot.lane.b32.xlu0 %v337, 15
          %v419 = vpop.permute.xlu0 %418
          %vm420 = vcmp.lt.s32.totalorder %v339, 15
          %v421 = vsel %vm420, %v417, %v419
          %v422 = vsel %vm420, %v419, %v417
          %s423 = sld [smem:[#allocation5 + $0x2]]
          %s424 = sld [smem:[#allocation5 + $0xb]]
          %v425 = vstv %s423
          %v426 = vmul.f32 %v425, %v422
          %v427 = vmul.f32 %v425, %v421
          %v428 = vstv %s424
          %v429 = vmul.f32 %v428, %v422
          %v430 = vmul.f32 %v428, %v421
          %v433 = vrot.slane %v429, 1
          %v434 = vrot.slane %v430, 1
          %v437 = vadd.f32 %v426, %v433
          %v438 = vadd.f32 %v427, %v434
          %v439 = vsel %vm414, %v437, 0.0
          %v440 = vsel %vm415, %v438, 0.0
          %v441 = vadd.f32 %v410, %v439
          %v442 = vadd.f32 %v411, %v440
          %443 = vrot.lane.b32.xlu0 %v336, 1
          %v444 = vpop.permute.xlu0 %443
          %445 = vrot.lane.b32.xlu0 %v337, 1
          %v446 = vpop.permute.xlu0 %445
          %vm447 = vcmp.lt.s32.totalorder %v339, 1
          %v448 = vsel %vm447, %v444, %v446
          %v449 = vsel %vm447, %v446, %v444
          %s450 = sld [smem:[#allocation5 + $0x3]]
          %s451 = sld [smem:[#allocation5 + $0xc]]
          %v452 = vstv %s450
          %v453 = vmul.f32 %v452, %v449
          %v454 = vmul.f32 %v452, %v448
          %v455 = vstv %s451
          %v456 = vmul.f32 %v455, %v449
          %v457 = vmul.f32 %v455, %v448
          %v460 = vrot.slane %v456, 1
          %v461 = vrot.slane %v457, 1
          %v464 = vadd.f32 %v453, %v460
          %v465 = vadd.f32 %v454, %v461
          %v466 = vsel %vm354, %v464, 0.0
          %v467 = vsel %vm355, %v465, 0.0
          %v468 = vadd.f32 %v441, %v466
          %v469 = vadd.f32 %v442, %v467
          %s470 = sld [smem:[#allocation5 + $0x4]]
          %s471 = sld [smem:[#allocation5 + $0xd]]
          %v472 = vstv %s470
          %v473 = vmul.f32 %v472, %v336
          %v474 = vmul.f32 %v472, %v337
          %v475 = vstv %s471
          %v476 = vmul.f32 %v475, %v336
          %v477 = vmul.f32 %v475, %v337
          %v480 = vrot.slane %v476, 1
          %v481 = vrot.slane %v477, 1
          %v484 = vadd.f32 %v473, %v480
          %v485 = vadd.f32 %v474, %v481
          %v486 = vadd.f32 %v468, %v484
          %v487 = vadd.f32 %v469, %v485
          %488 = vrot.lane.b32.xlu0 %v336, 127
          %v489 = vpop.permute.xlu0 %488
          %490 = vrot.lane.b32.xlu0 %v337, 127
          %v491 = vpop.permute.xlu0 %490
          %vm492 = vcmp.lt.s32.totalorder %v339, 127
          %v493 = vsel %vm492, %v489, %v491
          %v494 = vsel %vm492, %v491, %v489
          %s495 = sld [smem:[#allocation5 + $0x5]]
          %s496 = sld [smem:[#allocation5 + $0xe]]
          %v497 = vstv %s495
          %v498 = vmul.f32 %v497, %v493
          %v499 = vmul.f32 %v497, %v494
          %v500 = vstv %s496
          %v501 = vmul.f32 %v500, %v493
          %v502 = vmul.f32 %v500, %v494
          %v505 = vrot.slane %v501, 1
          %v506 = vrot.slane %v502, 1
          %v509 = vadd.f32 %v498, %v505
          %v510 = vadd.f32 %v499, %v506
          %v511 = vsel %vm412, %v509, 0.0
          %v512 = vsel %vm413, %v510, 0.0
          %v513 = vadd.f32 %v486, %v511
          %v514 = vadd.f32 %v487, %v512
          %vm515 = vcmp.le.f32.partialorder %v346, 14.5
          %vm516 = vcmp.le.f32.partialorder %v347, 14.5
          %vm517 = vmand %vm515, %vm354
          %vm518 = vmand %vm516, %vm355
          %519 = vrot.lane.b32.xlu0 %v336, 113
          %v520 = vpop.permute.xlu0 %519
          %521 = vrot.lane.b32.xlu0 %v337, 113
          %v522 = vpop.permute.xlu0 %521
          %vm523 = vcmp.lt.s32.totalorder %v339, 113
          %v524 = vsel %vm523, %v520, %v522
          %v525 = vsel %vm523, %v522, %v520
          %s526 = sld [smem:[#allocation5 + $0x6]]
          %s527 = sld [smem:[#allocation5 + $0xf]]
          %v528 = vstv %s526
          %v529 = vmul.f32 %v528, %v524
          %v530 = vmul.f32 %v528, %v525
          %v531 = vstv %s527
          %v532 = vmul.f32 %v531, %v524
          %v533 = vmul.f32 %v531, %v525
          %v536 = vrot.slane %v532, 1
          %v537 = vrot.slane %v533, 1
          %v540 = vadd.f32 %v529, %v536
          %v541 = vadd.f32 %v530, %v537
          %v542 = vsel %vm517, %v540, 0.0
          %v543 = vsel %vm518, %v541, 0.0
          %v544 = vadd.f32 %v513, %v542
          %v545 = vadd.f32 %v514, %v543
          %546 = vrot.lane.b32.xlu0 %v336, 112
          %v547 = vpop.permute.xlu0 %546
          %548 = vrot.lane.b32.xlu0 %v337, 112
          %v549 = vpop.permute.xlu0 %548
          %vm550 = vcmp.lt.s32.totalorder %v339, 112
          %v551 = vsel %vm550, %v547, %v549
          %v552 = vsel %vm550, %v549, %v547
          %s553 = sld [smem:[#allocation5 + $0x7]]
          %s554 = sld [smem:[#allocation5 + $0x10]]
          %v555 = vstv %s553
          %v556 = vmul.f32 %v555, %v551
          %v557 = vmul.f32 %v555, %v552
          %v558 = vstv %s554
          %v559 = vmul.f32 %v558, %v551
          %v560 = vmul.f32 %v558, %v552
          %v563 = vrot.slane %v559, 1
          %v564 = vrot.slane %v560, 1
          %v567 = vadd.f32 %v556, %v563
          %v568 = vadd.f32 %v557, %v564
          %v569 = vsel %vm515, %v567, 0.0
          %v570 = vsel %vm516, %v568, 0.0
          %v571 = vadd.f32 %v544, %v569
          %v572 = vadd.f32 %v545, %v570
          %vm573 = vmand %vm515, %vm412
          %vm574 = vmand %vm516, %vm413
          %575 = vrot.lane.b32.xlu0 %v336, 111
          %v576 = vpop.permute.xlu0 %575
          %577 = vrot.lane.b32.xlu0 %v337, 111
          %v578 = vpop.permute.xlu0 %577
          %vm579 = vcmp.lt.s32.totalorder %v339, 111
          %v580 = vsel %vm579, %v576, %v578
          %v581 = vsel %vm579, %v578, %v576
          %s582 = sld [smem:[#allocation5 + $0x8]]
          %s583 = sld [smem:[#allocation5 + $0x11]]
          %v584 = vstv %s582
          %v585 = vmul.f32 %v584, %v580
          %v586 = vmul.f32 %v584, %v581
          %v587 = vstv %s583
          %v588 = vmul.f32 %v587, %v580
          %v589 = vmul.f32 %v587, %v581
          %v592 = vrot.slane %v588, 1
          %v593 = vrot.slane %v589, 1
          %v596 = vadd.f32 %v585, %v592
          %v597 = vadd.f32 %v586, %v593
          %v598 = vsel %vm573, %v596, 0.0
          %v599 = vsel %vm574, %v597, 0.0
          %v600 = vadd.f32 %v571, %v598
          %v601 = vadd.f32 %v572, %v599
          %s602 = sld [smem:[#allocation4]]
          %v603 = vstv %s602
          %v604 = vadd.f32 %v600, %v603
          %v605 = vadd.f32 %v601, %v603
          %v606 = vxor.u32 %v604, 2147483648
          %v607 = vxor.u32 %v605, 2147483648
          %v608 = vmul.f32 %v606, 1.442695
          %v609 = vpow.pop %v608
          %v610 = vmul.f32 %v607, 1.442695
          %v611 = vpow.pop %v610
          %v612 = vadd.f32 %v609, 1.0
          %v613 = vadd.f32 %v611, 1.0
          %v614 = vrcp.pop %v612
          %v615 = vmul.f32 1.0, %v614
          %v616 = vrcp.pop %v613
          %v617 = vmul.f32 1.0, %v616
          %v620 = vcombine.low %v615, %v617
          %v622 = vunpack.c.l.s4 1966171168
          %v623 = vunpack.c.0.s8 %v622
          %v624 = vlaneseq
          %v625 = vshrl.u32 %v624, 7
          %v626 = vsub.s32 %v623, %v625
          %v627 = vrot.slane %v620, %v626
          %v629 = vunpack.c.l.s4 1966171168
          %v630 = vunpack.c.0.s8 %v629
          %v631 = vlaneseq
          %v632 = vshrl.u32 %v631, 7
          %v633 = vsub.s32 %v630, %v632
          %v634 = vrot.slane %v627, %v633
          %636 = vst.msk [vmem:[%s217] sm:$0x3] %vm284, %v634
        $region48: #{tpu_custom_call.1} parent=31 // pred_fallthru
          _
        %s637 = sand.u32 %s112, 1
        %s638 = scalar_lea.sflag [#allocation7], %s637
        %s639 = sand.u32 %s112, 1
        %s640 = smul.addr %s639, 2
        %s641 = scalar_lea.vmem [#allocation10], %s640
        // Predicated region
        $region49: #{tpu_custom_call.1} parent=31 // pred_check
          %p642 = pneg %p122
        $region50: #{tpu_custom_call.1} parent=31 // pred_check_branch
          %644 = sbr.rel (%p642) target = $region52
        $region51: #{tpu_custom_call.1} parent=31 // pred_region
          %s646 = ssub.s32 32, 32
          %647 = vsyncadd %s638, %s646
          %s648 = smul.addr %s26, 2
          %s649 = smul.addr %s648, 16
          %s650 = scalar_lea.hbm %s3, %s649
          %s652 = sshll.u32 %s641, 4
          %s653 = int_to_ptr.vmem [resolvable:$true] %s652
          %655 = dma.vmem_to_hbm [thread:$0]  %s653, 32, %s650, %s638
        $region52: #{tpu_custom_call.1} parent=31 // pred_fallthru
          _
      $region32: #{tpu_custom_call.1} parent=5 // pred_fallthru
        _
      %p656 = scmp.le.s32.totalorder 2, %s17
      // Predicated region
      $region53: #{tpu_custom_call.1} parent=5 // pred_check
        %p657 = pneg %p656
      $region54: #{tpu_custom_call.1} parent=5 // pred_check_branch
        %659 = sbr.rel (%p657) target = $region56
      $region55: #{tpu_custom_call.1} parent=5 // pred_region
        %s660 = ssub.s32 %s17, 2
        // Predicated region
        $region57: #{tpu_custom_call.1} parent=55 // pred_check
          %p661 = pneg %p128
        $region58: #{tpu_custom_call.1} parent=55 // pred_check_branch
          %663 = sbr.rel (%p661) target = $region60
        $region59: #{tpu_custom_call.1} parent=55 // pred_region
          %s664 = sand.u32 %s113, 1
          %s665 = scalar_lea.sflag [#allocation7], %s664
          %s666 = sand.u32 %s113, 1
          %s667 = smul.addr %s666, 2
          %s668 = scalar_lea.vmem [#allocation10], %s667
          %669 = dma.done %s665, 32
        $region60: #{tpu_custom_call.1} parent=55 // pred_fallthru
          _
      $region56: #{tpu_custom_call.1} parent=5 // pred_fallthru
        _
    $region6: #{tpu_custom_call.1} parent=1 // loop_footer
      %s21 = sadd.s32 1, %s17
    $region7: #{tpu_custom_call.1} parent=1 // loop_footer_branch
      %16 = sbr.rel target = $region3
    $region8: #{tpu_custom_call.1} parent=1 // loop_exit
      _
    %670 = vsyncpa [#allocation6], 1
    %s671 = scalar_lea.sflag [#allocation6], 1
    %672 = vsyncpa %s671, 1
    %673 = vsyncpa [#allocation7], 1
    %s674 = scalar_lea.sflag [#allocation7], 1
    %675 = vsyncpa %s674, 1
    %676 = vsyncpa [#allocation8], 1
    %s677 = scalar_lea.sflag [#allocation8], 1
    %678 = vsyncpa %s677, 1

</llo_original>
